<compile_context>
chip_gen: v5e
topology: v5e:2x2
jax: 0.10.0
libtpu: 0.0.40
codegen_flags: <defaults>
</compile_context>

<pallas_src>
import functools

import jax
import jax.numpy as jnp
import numpy as np
from jax.experimental import pallas as pl
from jax.experimental.pallas import tpu as pltpu

_BN_EPS = 1e-5
_SQRT_2_OVER_PI = 0.7978845608028654
_NEG_BIG = -1e30          # "minus infinity" bias for padded softmax columns
_LANE = 128


# ----------------------------- activations ---------------------------------
def _gelu_tanh(x):
    return 0.5 * x * (1.0 + jnp.tanh(_SQRT_2_OVER_PI * (x + 0.044715 * x * x * x)))


def _softmax_lastdim(x):
    m = jnp.max(x, axis=-1, keepdims=True)
    e = jnp.exp(x - m)
    denom = jnp.sum(e, axis=-1, keepdims=True)
    # Exact reciprocal (approx=True risks the 1e-5 row-sum / 1e-4 rtol checks).
    return e * pl.reciprocal(denom, approx=False)


# ------------------------------- kernel -------------------------------------
def _probe_stack_kernel(*refs, activations):
    """Fused probe stack.

    refs = (x_ref, w_0, b_0, w_1, b_1, ..., out_ref)
      x_ref : (tile_m, K0)       activation tile (tokens on sublanes), native dtype
      w_l   : (K_l, N_l_pad)     BN-folded, lane-padded weight, VMEM-resident
      b_l   : (1,   N_l_pad)     BN-folded, lane-padded bias,  VMEM-resident
      out   : (tile_m, N_last_pad)  lane-dense (multiple of 128)
    """
    n_layers = len(activations)
    x_ref = refs[0]
    o_ref = refs[1 + 2 * n_layers]

    h = x_ref[...].astype(jnp.float32)
    for li, act in enumerate(activations):
        w = refs[1 + 2 * li][...]
        b = refs[2 + 2 * li][...]
        h = jnp.dot(h, w, preferred_element_type=jnp.float32) + b
        if act == "gelu":
            h = _gelu_tanh(h)
        elif act == "softmax":
            h = _softmax_lastdim(h)
    o_ref[...] = h.astype(o_ref.dtype)


# ----------------------- parameter handling / folding -----------------------
def init_probe_hidden(key, in_dim, out_dim, is_output):
    """Parameters of one probe_hidden module (PyTorch-style init; BN params
    randomized so the BN fold is actually exercised)."""
    kw, kb, kg, kbe, km, kv = jax.random.split(key, 6)
    bound = 1.0 / np.sqrt(in_dim)
    return dict(
        weight=jax.random.uniform(kw, (out_dim, in_dim), jnp.float32, -bound, bound),
        bias=jax.random.uniform(kb, (out_dim,), jnp.float32, -bound, bound),
        gamma=jax.random.uniform(kg, (out_dim,), jnp.float32, 0.5, 1.5),
        beta=0.1 * jax.random.normal(kbe, (out_dim,), jnp.float32),
        running_mean=0.1 * jax.random.normal(km, (out_dim,), jnp.float32),
        running_var=jax.random.uniform(kv, (out_dim,), jnp.float32, 0.5, 1.5),
        activation="softmax" if is_output else "gelu",
    )


def build_probe(key, dim_inp, nunits_hidden, nunits_out):
    dims = [dim_inp] + list(nunits_hidden) + [nunits_out]
    layers = []
    for layer_id in range(len(dims) - 1):
        key, sub = jax.random.split(key)
        layers.append(
            init_probe_hidden(sub, dims[layer_id], dims[layer_id + 1],
                              is_output=(layer_id >= len(nunits_hidden))))
    return layers


def _round_up(x, m):
    return (x + m - 1) // m * m


def _fold_and_pad(layers):
    """Fold eval-mode BN into each Linear and lane-pad widths to 128 multiples.

    Padded weight columns are zero.  Padded bias is 0 for GELU layers
    (GELU(0)=0 keeps downstream layers exact) and -1e30 for the softmax head
    (exp underflows to 0, normalizer unchanged).  Padded input rows of the
    next layer are zero.
    """
    folded = []
    k_pad = None  # padded input dim for the current layer (None -> natural K)
    for layer in layers:
        s = layer["gamma"] / jnp.sqrt(layer["running_var"] + _BN_EPS)        # (out,)
        w = (layer["weight"] * s[:, None]).T                                 # (in, out)
        b = (layer["bias"] - layer["running_mean"]) * s + layer["beta"]      # (out,)
        act = layer["activation"]

        k, n = w.shape
        n_pad = max(_LANE, _round_up(n, _LANE))
        k_tgt = k if k_pad is None else k_pad
        w_p = jnp.zeros((k_tgt, n_pad), jnp.float32).at[:k, :n].set(w)
        fill = _NEG_BIG if act == "softmax" else 0.0
        b_p = jnp.full((1, n_pad), fill, jnp.float32).at[0, :n].set(b)

        folded.append((w_p, b_p, act, n))
        k_pad = n_pad
    return folded


# ------------------------------- wrappers ------------------------------------
def probe_forward(hidden_states, layers, *, tile_m=1024):
    """Apply a full probe (stack of probe_hidden layers) in ONE pallas_call."""
    orig_shape = hidden_states.shape
    feat = orig_shape[-1]
    # Stream the native dtype; the kernel up-casts its VMEM tile to f32.
    x = hidden_states.reshape(-1, feat)
    m = x.shape[0]

    folded = _fold_and_pad(layers)
    activations = tuple(f[2] for f in folded)
    n_out = folded[-1][3]              # real output width
    n_pad = folded[-1][0].shape[1]     # lane-dense output width (mult of 128)

    x_bytes = jnp.dtype(x.dtype).itemsize
    param_bytes = sum(int(w.size + b.size) * 4 for w, b, _, _ in folded)

    # --- tile-size selection (generation-aware VMEM budget) -------------------
    per_tok = 2 * feat * x_bytes + 2 * n_pad * 4          # double-buffered in+out
    budget = 40 * 1024 * 1024                             # safe within v7x 64 MiB/TC
    avail = max(budget - 2 * param_bytes, 8 * per_tok)
    tile_cap = max(8, (avail // per_tok) // 8 * 8)
    tile_half = max(8, _round_up(-(-m // 2), 8))          # grid >= 2 when m > 8 (v7x)
    tile = max(8, min(tile_m, tile_cap, tile_half))
    grid = pl.cdiv(m, tile)                               # ragged last block, no pad copy

    vmem_need = 2 * tile * feat * x_bytes + 2 * tile * n_pad * 4 + 2 * param_bytes
    vmem_limit = int(min(64 << 20, max(32 << 20, vmem_need + (8 << 20))))

    in_specs = [pl.BlockSpec((tile, feat), lambda i: (i, 0))]          # streamed
    operands = [x]
    for w, b, _, _ in folded:                                          # resident
        in_specs.append(pl.BlockSpec(w.shape, lambda i: (0, 0)))
        in_specs.append(pl.BlockSpec(b.shape, lambda i: (0, 0)))
        operands.extend([w, b])

    flops = 2 * m * sum(int(w.size) for w, _, _, _ in folded)
    transcendentals = m * sum(int(w.shape[1]) for w, _, _, _ in folded)
    bytes_accessed = m * feat * x_bytes + m * n_pad * 4 + param_bytes

    kernel = functools.partial(_probe_stack_kernel, activations=activations)
    out = pl.pallas_call(
        kernel,
        out_shape=jax.ShapeDtypeStruct((m, n_pad), jnp.float32),
        grid=(grid,),
        in_specs=in_specs,
        out_specs=pl.BlockSpec((tile, n_pad), lambda i: (i, 0)),
        compiler_params=pltpu.CompilerParams(
            dimension_semantics=("parallel",),    # shard token tiles over v7x TCs
            vmem_limit_bytes=vmem_limit,
        ),
        cost_estimate=pl.CostEstimate(
            flops=flops,
            transcendentals=transcendentals,
            bytes_accessed=bytes_accessed,
        ),
    )(*operands)

    out = out[:, :n_out]
    return out.reshape(*orig_shape[:-1], n_out)


def probe_hidden_forward(hidden_states, layer, **kwargs):
    """Forward of a single probe_hidden module (Linear -> BN -> activation)."""
    return probe_forward(hidden_states, [layer], **kwargs)


# ------------------------------ references -----------------------------------
def _softmax_ref(x):
    m = jnp.max(x, axis=-1, keepdims=True)
    e = jnp.exp(x - m)
    return e / jnp.sum(e, axis=-1, keepdims=True)


def _probe_hidden_reference(x, layer):
    z = x @ layer["weight"].T + layer["bias"]
    z = (z - layer["running_mean"]) / jnp.sqrt(layer["running_var"] + _BN_EPS)
    z = z * layer["gamma"] + layer["beta"]
    return _gelu_tanh(z) if layer["activation"] == "gelu" else _softmax_ref(z)


def probe_forward_reference(hidden_states, layers):
    feat = hidden_states.shape[-1]
    x = hidden_states.reshape(-1, feat).astype(jnp.float32)
    for layer in layers:
        x = _probe_hidden_reference(x, layer)
    return x.reshape(*hidden_states.shape[:-1], x.shape[-1])


# --------------------------------- main ---------------------------------------
if __name__ == "__main__":
    key = jax.random.PRNGKey(0)
    k_in, k_params = jax.random.split(key)

    # m = 2*7 = 14 tokens -> tile 8, grid 2, ragged last block (masked writes).
    batch, seq, dim_inp = 2, 7, 32
    nunits_hidden = (64, 64)
    nunits_out = 16

    hidden_states = jax.random.normal(k_in, (batch, seq, dim_inp), jnp.float32)
    layers = build_probe(k_params, dim_inp, nunits_hidden, nunits_out)

    # Single probe_hidden module (layer_id = 0: Linear -> BatchNorm1d -> GELU).
    out0 = jax.block_until_ready(probe_hidden_forward(hidden_states, layers[0]))
    ref0 = probe_forward_reference(hidden_states, [layers[0]])
    assert out0.shape == (batch, seq, nunits_hidden[0]), out0.shape
    np.testing.assert_allclose(np.asarray(out0), np.asarray(ref0), rtol=1e-4, atol=1e-5)

    # Full probe stack, fused into one pallas_call.
    out = jax.block_until_ready(probe_forward(hidden_states, layers))
    ref = probe_forward_reference(hidden_states, layers)
    assert out.shape == (batch, seq, nunits_out), out.shape
    np.testing.assert_allclose(np.asarray(out), np.asarray(ref), rtol=1e-4, atol=1e-5)
    # Softmax head: rows must sum to 1 (padded -1e30 columns must not leak in).
    np.testing.assert_allclose(np.asarray(out).sum(-1), 1.0, rtol=1e-5, atol=1e-5)

    print("KERNEL_OK")
</pallas_src>

<mosaic_0001>
module attributes {stable_mosaic.version = 11 : i64} {
  func.func @_probe_stack_kernel(%arg0: i32, %arg1: memref<8x32xf32, #tpu.memory_space<vmem>>, %arg2: memref<32x128xf32, #tpu.memory_space<vmem>>, %arg3: memref<1x128xf32, #tpu.memory_space<vmem>>, %arg4: memref<8x128xf32, #tpu.memory_space<vmem>>) attributes {dimension_semantics = [#tpu.dimension_semantics<parallel>], iteration_bounds = array<i64: 2>, scalar_prefetch = 0 : i64, scratch_operands = 0 : i64, tpu.core_type = #tpu.core_type<tc>, window_params = [{transform_indices = @transform_0, window_bounds = array<i64: 8, 32>}, {pipeline_mode = #tpu.pipeline_mode<synchronous>, transform_indices = @transform_1, window_bounds = array<i64: 32, 128>}, {pipeline_mode = #tpu.pipeline_mode<synchronous>, transform_indices = @transform_2, window_bounds = array<i64: 1, 128>}, {transform_indices = @transform_3, window_bounds = array<i64: 8, 128>}]} {
    %c0 = arith.constant 0 : index
    %c0_0 = arith.constant 0 : index
    %0 = vector.load %arg1[%c0, %c0_0] : memref<8x32xf32, #tpu.memory_space<vmem>>, vector<8x32xf32>
    %c0_1 = arith.constant 0 : index
    %c0_2 = arith.constant 0 : index
    %1 = vector.load %arg2[%c0_1, %c0_2] : memref<32x128xf32, #tpu.memory_space<vmem>>, vector<32x128xf32>
    %c0_3 = arith.constant 0 : index
    %c0_4 = arith.constant 0 : index
    %2 = vector.load %arg3[%c0_3, %c0_4] : memref<1x128xf32, #tpu.memory_space<vmem>>, vector<1x128xf32>
    %cst = arith.constant dense<0.000000e+00> : vector<8x128xf32>
    %3 = tpu.matmul %0, %1, %cst {dimension_numbers = #tpu.dot_dimension_numbers<[1], [0], [0], [1], [0, 0, 1, 1], [], []>} : vector<8x32xf32>, vector<32x128xf32>, vector<8x128xf32> -> vector<8x128xf32>
    %4 = vector.broadcast %2 : vector<1x128xf32> to vector<8x128xf32>
    %5 = arith.addf %3, %4 : vector<8x128xf32>
    %cst_5 = arith.constant 5.000000e-01 : f32
    %6 = vector.broadcast %cst_5 : f32 to vector<8x128xf32>
    %7 = arith.mulf %6, %5 : vector<8x128xf32>
    %cst_6 = arith.constant 4.471500e-02 : f32
    %8 = vector.broadcast %cst_6 : f32 to vector<8x128xf32>
    %9 = arith.mulf %8, %5 : vector<8x128xf32>
    %10 = arith.mulf %9, %5 : vector<8x128xf32>
    %11 = arith.mulf %10, %5 : vector<8x128xf32>
    %12 = arith.addf %5, %11 : vector<8x128xf32>
    %cst_7 = arith.constant 0.797884583 : f32
    %13 = vector.broadcast %cst_7 : f32 to vector<8x128xf32>
    %14 = arith.mulf %13, %12 : vector<8x128xf32>
    %15 = math.tanh %14 : vector<8x128xf32>
    %cst_8 = arith.constant 1.000000e+00 : f32
    %16 = vector.broadcast %cst_8 : f32 to vector<8x128xf32>
    %17 = arith.addf %16, %15 : vector<8x128xf32>
    %18 = arith.mulf %7, %17 : vector<8x128xf32>
    %c0_9 = arith.constant 0 : index
    %c0_10 = arith.constant 0 : index
    %19 = vector.load %arg4[%c0_9, %c0_10] : memref<8x128xf32, #tpu.memory_space<vmem>>, vector<8x128xf32>
    tpu.vector_store %arg4[%c0_9, %c0_10], %18 {strides = array<i32>} : memref<8x128xf32, #tpu.memory_space<vmem>>, vector<8x128xf32>,
    return
  }
  func.func @transform_0(%arg0: i32) -> (i32, i32) {
    %c0_i32 = arith.constant 0 : i32
    %c0_i32_0 = arith.constant 0 : i32
    return %arg0, %c0_i32 : i32, i32
  }
  func.func @transform_1(%arg0: i32) -> (i32, i32) {
    %c0_i32 = arith.constant 0 : i32
    %c0_i32_0 = arith.constant 0 : i32
    %c0_i32_1 = arith.constant 0 : i32
    return %c0_i32, %c0_i32_0 : i32, i32
  }
  func.func @transform_2(%arg0: i32) -> (i32, i32) {
    %c0_i32 = arith.constant 0 : i32
    %c0_i32_0 = arith.constant 0 : i32
    %c0_i32_1 = arith.constant 0 : i32
    return %c0_i32, %c0_i32_0 : i32, i32
  }
  func.func @transform_3(%arg0: i32) -> (i32, i32) {
    %c0_i32 = arith.constant 0 : i32
    %c0_i32_0 = arith.constant 0 : i32
    return %arg0, %c0_i32 : i32, i32
  }
}

</mosaic_0001>

<llo_original>
// kernel: tpu_custom_call.1
$region0: #{tpu_custom_call.1}
  #allocation0 [shape = 'u32[]', space=smem, size = 0x4, offset = 0x4, fixed_abs, tag = 'smem constant byte address 0x4 - core index']
  #allocation1 [shape = 'u32[72,128]{1,0:T(1,128)}', space=vmem, size = 0x9000, scoped, tag = 'internal scratch']
  %s0 = inlined_call_operand.hbm [shape: f32[14,32], index: 0, kind: input, shape index: {}]
  %s1 = inlined_call_operand.hbm [shape: f32[32,128], index: 1, kind: input, shape index: {}]
  %s2 = inlined_call_operand.vmem [shape: f32[1,128], index: 2, kind: input, shape index: {}]
  %s3 = inlined_call_operand.hbm [shape: f32[14,128], index: 3, kind: output, shape index: {}]
  %s4 = sld [smem:[#allocation0]]
  $region53: #{tpu_custom_call.1} parent=0
    _
  %s6 = ssub.s32 1, %s4
  %s7 = scalar_select 0, %s6, %s4
  $region1: #{tpu_custom_call.1} parent=0
    #allocation2 [shape = 'u8[8192]{0}', space=vmem, size = 0x2000, scoped, tag = 'input window, operand 0']
    #allocation3 [shape = 's32[2]{0}', space=sflag, size = 0x8, scoped, tag = 'scoped memory for tpu_custom_call.1']
    #allocation4 [shape = 's32[2]{0}', space=sflag, size = 0x8, scoped, tag = 'scoped memory for tpu_custom_call.1']
    #allocation5 [shape = 'u8[16384]{0}', space=vmem, size = 0x4000, scoped, tag = 'input window, operand 1, single buffered']
    #allocation6 [shape = 's32[1]{0}', space=sflag, size = 0x4, scoped, tag = 'scoped memory for tpu_custom_call.1']
    #allocation7 [shape = 'u8[8192]{0}', space=vmem, size = 0x2000, scoped, tag = 'output window, operand 0']
    %8 = vsyncpa [#allocation3], 0
    %s9 = scalar_lea.sflag [#allocation3], 1
    %10 = vsyncpa %s9, 0
    %11 = vsyncpa [#allocation6], 0
    %12 = vsyncpa [#allocation4], 0
    %s13 = scalar_lea.sflag [#allocation4], 1
    %14 = vsyncpa %s13, 0
    loop: start=0, step=1, limit=4
    $region2: #{tpu_custom_call.1} parent=1 // loop_pre_header
      _
    $region3: #{tpu_custom_call.1} parent=1 // loop_header
      %s16 = sphi 0, %s20
      %p17 = scmp.ge.s32.totalorder %s16, 4
      %s26 = sphi 0, %s28
      %s29 = sphi 0, %s26
      %s30 = sphi 0, %s29
      %s46 = sphi 0, %s30
      %s50 = sphi 0, %s50
      %s52 = sphi 0, %s50
      %s53 = sphi 0, %s52
      %s67 = sphi 0, %s53
      %s71 = sphi 0, %s71
      %s73 = sphi 0, %s71
      %s74 = sphi 0, %s73
      %s88 = sphi 0, %s74
      %s94 = sphi 0, %s96
      %s97 = sphi 0, %s94
      %s98 = sphi 0, %s97
      %s114 = sphi 0, %s98
    $region4: #{tpu_custom_call.1} parent=1 // loop_header_branch
      %19 = sbr.rel (%p17) target = $region8
    $region5: #{tpu_custom_call.1} parent=1 // loop_body
      %s21 = ssub.s32 %s16, 1
      %s22 = ssub.s32 %s16, 2
      %s23 = sadd.s32 %s16, 1
      %s24 = ssub.s32 %s16, %s23
      %p25 = scmp.eq.s32.totalorder %s24, 0
      %s27 = sadd.s32 %s26, 1
      %s28 = scalar_select %p25, %s26, %s27
      %p31 = pneg %p25
      %p32 = scmp.eq.s32.totalorder %s16, 1
      %p33 = por %p31, %p32
      %p34 = scmp.ne.s32.totalorder %s26, %s29
      %p35 = scmp.eq.s32.totalorder %s16, 0
      %p36 = por %p34, %p35
      %p37 = scmp.ne.s32.totalorder %s26, %s29
      %p38 = scmp.eq.s32.totalorder %s21, 1
      %p39 = por %p37, %p38
      %p40 = scmp.ne.s32.totalorder %s29, %s30
      %p41 = scmp.eq.s32.totalorder %s21, 0
      %p42 = por %p40, %p41
      %p43 = scmp.ne.s32.totalorder %s29, %s30
      %p44 = scmp.eq.s32.totalorder %s22, 1
      %p45 = por %p43, %p44
      %p47 = scmp.ne.s32.totalorder %s30, %s46
      %p48 = scmp.eq.s32.totalorder %s22, 0
      %p49 = por %p47, %p48
      %s51 = sadd.s32 %s50, 1
      %p54 = scmp.eq.s32.totalorder %s16, 1
      %p55 = scmp.ne.s32.totalorder %s50, %s52
      %p56 = scmp.eq.s32.totalorder %s16, 0
      %p57 = por %p55, %p56
      %p58 = scmp.ne.s32.totalorder %s50, %s52
      %p59 = scmp.eq.s32.totalorder %s21, 1
      %p60 = por %p58, %p59
      %p61 = scmp.ne.s32.totalorder %s52, %s53
      %p62 = scmp.eq.s32.totalorder %s21, 0
      %p63 = por %p61, %p62
      %p64 = scmp.ne.s32.totalorder %s52, %s53
      %p65 = scmp.eq.s32.totalorder %s22, 1
      %p66 = por %p64, %p65
      %p68 = scmp.ne.s32.totalorder %s53, %s67
      %p69 = scmp.eq.s32.totalorder %s22, 0
      %p70 = por %p68, %p69
      %s72 = sadd.s32 %s71, 1
      %p75 = scmp.eq.s32.totalorder %s16, 1
      %p76 = scmp.ne.s32.totalorder %s71, %s73
      %p77 = scmp.eq.s32.totalorder %s16, 0
      %p78 = por %p76, %p77
      %p79 = scmp.ne.s32.totalorder %s71, %s73
      %p80 = scmp.eq.s32.totalorder %s21, 1
      %p81 = por %p79, %p80
      %p82 = scmp.ne.s32.totalorder %s73, %s74
      %p83 = scmp.eq.s32.totalorder %s21, 0
      %p84 = por %p82, %p83
      %p85 = scmp.ne.s32.totalorder %s73, %s74
      %p86 = scmp.eq.s32.totalorder %s22, 1
      %p87 = por %p85, %p86
      %p89 = scmp.ne.s32.totalorder %s74, %s88
      %p90 = scmp.eq.s32.totalorder %s22, 0
      %p91 = por %p89, %p90
      %s92 = ssub.s32 %s16, %s23
      %p93 = scmp.eq.s32.totalorder %s92, 0
      %s95 = sadd.s32 %s94, 1
      %s96 = scalar_select %p93, %s94, %s95
      %p99 = pneg %p93
      %p100 = scmp.eq.s32.totalorder %s16, 1
      %p101 = por %p99, %p100
      %p102 = scmp.ne.s32.totalorder %s94, %s97
      %p103 = scmp.eq.s32.totalorder %s16, 0
      %p104 = por %p102, %p103
      %p105 = scmp.ne.s32.totalorder %s94, %s97
      %p106 = scmp.eq.s32.totalorder %s21, 1
      %p107 = por %p105, %p106
      %p108 = scmp.ne.s32.totalorder %s97, %s98
      %p109 = scmp.eq.s32.totalorder %s21, 0
      %p110 = por %p108, %p109
      %p111 = scmp.ne.s32.totalorder %s97, %s98
      %p112 = scmp.eq.s32.totalorder %s22, 1
      %p113 = por %p111, %p112
      %p115 = scmp.ne.s32.totalorder %s98, %s114
      %p116 = scmp.eq.s32.totalorder %s22, 0
      %p117 = por %p115, %p116
      %p118 = scmp.le.s32.totalorder 1, %s16
      %p119 = scmp.lt.s32.totalorder %s16, 3
      %p120 = pnand %p118, %p119
      %p121 = pneg %p120
      // Predicated region
      $region9: #{tpu_custom_call.1} parent=5 // pred_check
        _
      $region10: #{tpu_custom_call.1} parent=5 // pred_check_branch
        %123 = sbr.rel (%p120) target = $region12
      $region11: #{tpu_custom_call.1} parent=5 // pred_region
        %s124 = ssub.s32 %s16, 1
        // Predicated region
        $region13: #{tpu_custom_call.1} parent=11 // pred_check
          %p125 = pneg %p63
        $region14: #{tpu_custom_call.1} parent=11 // pred_check_branch
          %127 = sbr.rel (%p125) target = $region16
        $region15: #{tpu_custom_call.1} parent=11 // pred_region
          %129 = vsyncadd [#allocation6], 0
          %s130 = sshll.u32 %s1, 4
          %s131 = int_to_ptr.hbm [resolvable:$true] %s130
          %s132 = sshll.u32 [#allocation5], 4
          %s133 = int_to_ptr.vmem [resolvable:$true] %s132
          %138 = dma.hbm_to_vmem [thread:$0]  %s131, 512, %s133, [#allocation6], 128, 128, 8
        $region16: #{tpu_custom_call.1} parent=11 // pred_fallthru
          _
        // Predicated region
        $region17: #{tpu_custom_call.1} parent=11 // pred_check
          %p139 = pneg %p84
        $region18: #{tpu_custom_call.1} parent=11 // pred_check_branch
          %141 = sbr.rel (%p139) target = $region20
        $region19: #{tpu_custom_call.1} parent=11 // pred_region
          _
        $region20: #{tpu_custom_call.1} parent=11 // pred_fallthru
          _
      $region12: #{tpu_custom_call.1} parent=5 // pred_fallthru
        _
      %p142 = scmp.lt.s32.totalorder %s16, 2
      // Predicated region
      $region21: #{tpu_custom_call.1} parent=5 // pred_check
        %p143 = pneg %p142
      $region22: #{tpu_custom_call.1} parent=5 // pred_check_branch
        %145 = sbr.rel (%p143) target = $region24
      $region23: #{tpu_custom_call.1} parent=5 // pred_region
        // Predicated region
        $region25: #{tpu_custom_call.1} parent=23 // pred_check
          %p146 = pneg %p36
        $region26: #{tpu_custom_call.1} parent=23 // pred_check_branch
          %148 = sbr.rel (%p146) target = $region28
        $region27: #{tpu_custom_call.1} parent=23 // pred_region
          %s149 = sand.u32 %s26, 1
          %s150 = scalar_lea.sflag [#allocation3], %s149
          %s151 = sand.u32 %s26, 1
          %s152 = smul.addr %s151, 8
          %s153 = scalar_lea.vmem [#allocation2], %s152
          %155 = vsyncadd %s150, 0
          %s156 = smul.addr %s16, 8
          %s157 = scalar_lea.hbm %s0, %s156
          %s159 = sshll.u32 %s157, 4
          %s160 = int_to_ptr.hbm [resolvable:$true] %s159
          %s161 = sshll.u32 %s153, 4
          %s162 = int_to_ptr.vmem [resolvable:$true] %s161
          %164 = dma.hbm_to_vmem [thread:$0]  %s160, 128, %s162, %s150
        $region28: #{tpu_custom_call.1} parent=23 // pred_fallthru
          _
      $region24: #{tpu_custom_call.1} parent=5 // pred_fallthru
        _
      %p165 = scmp.le.s32.totalorder 1, %s16
      %p166 = scmp.lt.s32.totalorder %s16, 3
      %p167 = pnand %p165, %p166
      %p168 = pneg %p167
      // Predicated region
      $region29: #{tpu_custom_call.1} parent=5 // pred_check
        _
      $region30: #{tpu_custom_call.1} parent=5 // pred_check_branch
        %170 = sbr.rel (%p167) target = $region32
      $region31: #{tpu_custom_call.1} parent=5 // pred_region
        %s171 = ssub.s32 %s16, 1
        %s172 = sand.u32 %s29, 1
        %s173 = scalar_lea.sflag [#allocation3], %s172
        %s174 = sand.u32 %s29, 1
        %s175 = smul.addr %s174, 8
        %s176 = scalar_lea.vmem [#allocation2], %s175
        // Predicated region
        $region33: #{tpu_custom_call.1} parent=31 // pred_check
          %p177 = pneg %p42
        $region34: #{tpu_custom_call.1} parent=31 // pred_check_branch
          %179 = sbr.rel (%p177) target = $region36
        $region35: #{tpu_custom_call.1} parent=31 // pred_region
          %181 = dma.done %s173, 128
        $region36: #{tpu_custom_call.1} parent=31 // pred_fallthru
          _
        // Predicated region
        $region37: #{tpu_custom_call.1} parent=31 // pred_check
          %p182 = pneg %p63
        $region38: #{tpu_custom_call.1} parent=31 // pred_check_branch
          %184 = sbr.rel (%p182) target = $region40
        $region39: #{tpu_custom_call.1} parent=31 // pred_region
          %186 = dma.done [#allocation6], 512
        $region40: #{tpu_custom_call.1} parent=31 // pred_fallthru
          _
        %s187 = sand.u32 %s29, 1
        %s188 = scalar_lea.sflag [#allocation3], %s187
        %s189 = sand.u32 %s29, 1
        %s190 = smul.addr %s189, 8
        %s191 = scalar_lea.vmem [#allocation2], %s190
        %p192 = pneg %p42
        %p193 = pneg %p39
        %p194 = pneg %p63
        %p195 = pneg %p60
        %p196 = pneg %p84
        %p197 = pneg %p81
        %p198 = pneg %p110
        %p199 = pneg %p107
        %s200 = sand.u32 %s97, 1
        %s201 = scalar_lea.sflag [#allocation4], %s200
        %s202 = sand.u32 %s97, 1
        %s203 = smul.addr %s202, 8
        %s204 = scalar_lea.vmem [#allocation7], %s203
        %v205 = vld [vmem:[%s176] sm:$0xff]
        %v206 = vld [vmem:[#allocation5] sm:$0xff]
        %v207 = vld [vmem:[#allocation5 + $0x8] sm:$0xff]
        %v208 = vld [vmem:[#allocation5 + $0x10] sm:$0xff]
        %v209 = vld [vmem:[#allocation5 + $0x18] sm:$0xff]
        %v210 = vld [vmem:[%s2] sm:$0x1]
        %v212 = vperm.slane %v210, 0
        %vm214 = vcmask 261120
        %v216 = vsel %vm214, %v205, 0
        %218 = vmatpush.msra.mxu0 0.0
        %219 = vmatpush.msra.mxu0 0.0
        %220 = vmatpush.msra.mxu0 0.0
        %221 = vmatpush.msra.mxu0 0.0
        %222 = vmatpush.msra.mxu0 0.0
        %223 = vmatpush.msra.mxu0 0.0
        %224 = vmatpush.msra.mxu0 0.0
        %225 = vmatpush.msra.mxu0 0.0
        %226 = vmatpush.msra.mxu0 0.0
        %227 = vmatpush.msra.mxu0 0.0
        %228 = vmatpush.msra.mxu0 0.0
        %229 = vmatpush.msra.mxu0 0.0
        %230 = vmatpush.msra.mxu0 %v209
        %231 = vmatpush.msra.mxu0 %v208
        %232 = vmatpush.msra.mxu0 %v207
        %233 = vmatpush.msra.mxu0 %v206
        %234 = vmatmul.f32.gmra.mxu0 %v216
        %v235 = vpop.f32.mrf.mxu0
        %v236 = vadd.f32 %v212, %v235
        %237 = vdwg.mxu0
        %v238 = vmul.f32 %v236, 0.5
        %v239 = vmul.f32 %v236, 0.044715
        %v240 = vmul.f32 %v239, %v236
        %v241 = vmul.f32 %v240, %v236
        %v242 = vadd.f32 %v236, %v241
        %v243 = vmul.f32 %v242, 0.7978846
        %v244 = vtanh.pop %v243
        %v245 = vadd.f32 %v244, 1.0
        %v246 = vmul.f32 %v238, %v245
        %247 = vst [vmem:[%s204] sm:$0xff] %v246
        %s248 = sand.u32 %s97, 1
        %s249 = scalar_lea.sflag [#allocation4], %s248
        %s250 = sand.u32 %s97, 1
        %s251 = smul.addr %s250, 8
        %s252 = scalar_lea.vmem [#allocation7], %s251
        // Predicated region
        $region41: #{tpu_custom_call.1} parent=31 // pred_check
          %p253 = pneg %p107
        $region42: #{tpu_custom_call.1} parent=31 // pred_check_branch
          %255 = sbr.rel (%p253) target = $region44
        $region43: #{tpu_custom_call.1} parent=31 // pred_region
          %257 = vsyncadd %s249, 0
          %s258 = smul.addr %s21, 8
          %s259 = scalar_lea.hbm %s3, %s258
          %s261 = sshll.u32 %s252, 4
          %s262 = int_to_ptr.vmem [resolvable:$true] %s261
          %s263 = sshll.u32 %s259, 4
          %s264 = int_to_ptr.hbm [resolvable:$true] %s263
          %266 = dma.vmem_to_hbm [thread:$0]  %s262, 128, %s264, %s249
        $region44: #{tpu_custom_call.1} parent=31 // pred_fallthru
          _
      $region32: #{tpu_custom_call.1} parent=5 // pred_fallthru
        _
      %p267 = scmp.le.s32.totalorder 2, %s16
      // Predicated region
      $region45: #{tpu_custom_call.1} parent=5 // pred_check
        %p268 = pneg %p267
      $region46: #{tpu_custom_call.1} parent=5 // pred_check_branch
        %270 = sbr.rel (%p268) target = $region48
      $region47: #{tpu_custom_call.1} parent=5 // pred_region
        %s271 = ssub.s32 %s16, 2
        // Predicated region
        $region49: #{tpu_custom_call.1} parent=47 // pred_check
          %p272 = pneg %p113
        $region50: #{tpu_custom_call.1} parent=47 // pred_check_branch
          %274 = sbr.rel (%p272) target = $region52
        $region51: #{tpu_custom_call.1} parent=47 // pred_region
          %s275 = sand.u32 %s98, 1
          %s276 = scalar_lea.sflag [#allocation4], %s275
          %s277 = sand.u32 %s98, 1
          %s278 = smul.addr %s277, 8
          %s279 = scalar_lea.vmem [#allocation7], %s278
          %281 = dma.done %s276, 128
        $region52: #{tpu_custom_call.1} parent=47 // pred_fallthru
          _
      $region48: #{tpu_custom_call.1} parent=5 // pred_fallthru
        _
    $region6: #{tpu_custom_call.1} parent=1 // loop_footer
      %s20 = sadd.s32 1, %s16
    $region7: #{tpu_custom_call.1} parent=1 // loop_footer_branch
      %15 = sbr.rel target = $region3
    $region8: #{tpu_custom_call.1} parent=1 // loop_exit
      _
    %282 = vsyncpa [#allocation3], 1
    %s283 = scalar_lea.sflag [#allocation3], 1
    %284 = vsyncpa %s283, 1
    %285 = vsyncpa [#allocation6], 1
    %286 = vsyncpa [#allocation4], 1
    %s287 = scalar_lea.sflag [#allocation4], 1
    %288 = vsyncpa %s287, 1

</llo_original>
